<compile_context>
chip_gen: v7x
topology: tpu7x:2x2x1
jax: 0.10.0
libtpu: 0.0.40
codegen_flags: <defaults>
</compile_context>

<pallas_src>
import functools

import jax
import jax.numpy as jnp
from jax import lax
from jax.experimental import pallas as pl
from jax.experimental.pallas import tpu as pltpu


def _tensorcores_per_chip() -> int:
    """Best-effort TensorCore-per-chip query; defaults to 1 when unknown."""
    try:
        info = pltpu.get_tpu_info()
    except Exception:
        return 1
    for attr in ("num_cores", "cores_per_chip", "tensorcore_count", "num_tensorcores"):
        n = getattr(info, attr, None)
        if isinstance(n, int) and 1 <= n <= 8:
            return n
    return 1


def _prenorm_attention_kernel(x_ref, g_ref, b_ref, wqkv_ref, wo_ref, bo_ref,
                              o_ref, attn_ref,
                              *, bb, N, heads, dim_head, eps, approx_recip):
    """One grid step = `bb` batch elements, rows pre-flattened to (bb*N, D).

    x_ref    : (bb*N, D)          VMEM  input rows for this step
    g_ref    : (1, D)             VMEM  LayerNorm gamma
    b_ref    : (1, D)             VMEM  LayerNorm beta
    wqkv_ref : (D, 3*H*dh)        VMEM  packed [q|k|v] weights (scale folded in Q)
    wo_ref   : (H*dh, D)          VMEM  output-projection weight
    bo_ref   : (1, D)             VMEM  output-projection bias
    o_ref    : (bb*N, D)          VMEM  output rows
    attn_ref : (bb*N, H*dh) f32   VMEM  scratch: assembled attention output
    """
    M, D = o_ref.shape
    inner = heads * dim_head

    # ---- LayerNorm (f32 VPU/EUP math) --------------------------------------
    x = x_ref[...].astype(jnp.float32)                       # (M, D)
    mu = jnp.mean(x, axis=-1, keepdims=True)
    xc = x - mu
    var = jnp.mean(xc * xc, axis=-1, keepdims=True)
    xn = xc * lax.rsqrt(var + eps)
    xn = xn * g_ref[...].astype(jnp.float32) + b_ref[...].astype(jnp.float32)

    # ---- Single fused qkv projection (lane-dense 3*H*dh-wide operand) ------
    xn_mm = xn.astype(wqkv_ref.dtype)   # feed MXU in stored weight dtype
    qkv = jnp.dot(xn_mm, wqkv_ref[...],
                  preferred_element_type=jnp.float32)         # (M, 3*inner)

    # ---- Per (head, batch) attention; results go straight to VMEM scratch --
    for h in range(heads):                                    # static unroll (H small)
        q_off = h * dim_head
        k_off = inner + h * dim_head
        v_off = 2 * inner + h * dim_head
        for b in range(bb):                                   # static unroll (bb small)
            r0 = b * N
            q = qkv[r0:r0 + N, q_off:q_off + dim_head]        # (N, dh)  scale pre-folded
            k = qkv[r0:r0 + N, k_off:k_off + dim_head]
            v = qkv[r0:r0 + N, v_off:v_off + dim_head]

            # q @ k^T (contract dh on both operands)
            dots = lax.dot_general(q, k, (((1,), (1,)), ((), ())),
                                   preferred_element_type=jnp.float32)  # (N, N)
            dots = dots - jnp.max(dots, axis=-1, keepdims=True)
            e = jnp.exp(dots)
            denom = jnp.sum(e, axis=-1, keepdims=True)
            if approx_recip:
                p = e * pl.reciprocal(denom, approx=True)     # EUP slot
            else:
                p = e / denom
            attn_ref[r0:r0 + N, q_off:q_off + dim_head] = jnp.dot(
                p, v, preferred_element_type=jnp.float32)     # (N, dh)

    # ---- Single fused output projection + bias (added once) ----------------
    out = jnp.dot(attn_ref[...], wo_ref[...].astype(jnp.float32),
                  preferred_element_type=jnp.float32)
    out = out + bo_ref[...].astype(jnp.float32)
    o_ref[...] = out.astype(o_ref.dtype)


def prenorm_attention_pallas(x, ln_gamma, ln_beta, w_qkv, w_out, b_out,
                             *, heads, dim_head, eps=1e-5,
                             approx_softmax_recip=True):
    """PreNorm(Attention) forward.

    x        : (B, N, D)
    ln_gamma : (D,)                  LayerNorm weight
    ln_beta  : (D,)                  LayerNorm bias
    w_qkv    : (D, 3*heads*dim_head) to_qkv weight (math layout, no bias)
    w_out    : (heads*dim_head, D)   to_out weight (math layout)
    b_out    : (D,)                  to_out bias
    returns  : (B, N, D)
    """
    B, N, D = x.shape
    inner = heads * dim_head
    scale = dim_head ** (-0.5)

    # ---- static weight prep (trace-time, free) -----------------------------
    # Fold the softmax scale into the Q third of the packed qkv weight.
    w_q_scaled = w_qkv[:, :inner] * jnp.asarray(scale, w_qkv.dtype)
    w_qkv_packed = jnp.concatenate([w_q_scaled, w_qkv[:, inner:]], axis=-1)  # (D, 3*inner)
    g2 = ln_gamma.reshape(1, D)
    b2 = ln_beta.reshape(1, D)
    bo2 = b_out.reshape(1, D)

    # ---- grid selection -----------------------------------------------------
    # Single step on 1-TC chips (v5e/v6e) to avoid serial per-step overhead.
    # Split the batch over cores (CORE_PARALLEL) only when the chip confidently
    # reports >= 2 TensorCores (v7x / megacore) and the batch splits evenly.
    num_cores = _tensorcores_per_chip()
    if num_cores >= 2 and B % 2 == 0 and B >= 2 and ((B // 2) * N) % 8 == 0:
        grid_b = 2
        core_parallel = getattr(pltpu, "CORE_PARALLEL", "parallel")
        dim_sem = (core_parallel,)
    else:
        grid_b = 1
        dim_sem = ("arbitrary",)
    bb = B // grid_b
    M = bb * N

    x2 = x.reshape(B * N, D)   # flat row slab

    kernel = functools.partial(
        _prenorm_attention_kernel,
        bb=bb, N=N, heads=heads, dim_head=dim_head, eps=eps,
        approx_recip=approx_softmax_recip)

    out = pl.pallas_call(
        kernel,
        out_shape=jax.ShapeDtypeStruct((B * N, D), x.dtype),
        grid_spec=pltpu.PrefetchScalarGridSpec(
            num_scalar_prefetch=0,
            grid=(grid_b,),
            in_specs=[
                pl.BlockSpec((M, D), lambda g: (g, 0)),             # x rows
                pl.BlockSpec((1, D), lambda g: (0, 0)),             # gamma
                pl.BlockSpec((1, D), lambda g: (0, 0)),             # beta
                pl.BlockSpec((D, 3 * inner), lambda g: (0, 0)),     # packed qkv weight
                pl.BlockSpec((inner, D), lambda g: (0, 0)),         # out-proj weight
                pl.BlockSpec((1, D), lambda g: (0, 0)),             # out-proj bias
            ],
            out_specs=pl.BlockSpec((M, D), lambda g: (g, 0)),
            scratch_shapes=[pltpu.VMEM((M, inner), jnp.float32)],   # attention output
        ),
        compiler_params=pltpu.CompilerParams(
            dimension_semantics=dim_sem,
            vmem_limit_bytes=32 * 1024 * 1024),
    )(x2, g2, b2, w_qkv_packed, w_out, bo2)

    return out.reshape(B, N, D)


def prenorm_attention_reference(x, ln_gamma, ln_beta, w_qkv, w_out, b_out,
                                *, heads, dim_head, eps=1e-5):
    """Pure-JAX reference mirroring PreNorm(Attention) in PyTorch."""
    B, N, D = x.shape
    inner = heads * dim_head
    scale = dim_head ** (-0.5)

    mu = jnp.mean(x, axis=-1, keepdims=True)
    var = jnp.mean((x - mu) ** 2, axis=-1, keepdims=True)
    xn = (x - mu) / jnp.sqrt(var + eps) * ln_gamma + ln_beta

    qkv = xn @ w_qkv                                           # (B, N, 3*inner)
    q, k, v = jnp.split(qkv, 3, axis=-1)

    def split_heads(t):  # b n (h d) -> b h n d
        return t.reshape(B, N, heads, dim_head).transpose(0, 2, 1, 3)

    q, k, v = split_heads(q), split_heads(k), split_heads(v)
    dots = jnp.einsum("bhnd,bhmd->bhnm", q, k) * scale
    attn = jax.nn.softmax(dots, axis=-1)
    out = jnp.einsum("bhnm,bhmd->bhnd", attn, v)
    out = out.transpose(0, 2, 1, 3).reshape(B, N, inner)       # b h n d -> b n (h d)
    return out @ w_out + b_out


if __name__ == "__main__":
    # Config consistent with light_row_transformer: dim=32, heads=2, dim_head=32
    dim, heads, dim_head = 32, 2, 32
    inner = heads * dim_head
    N = 8

    key = jax.random.PRNGKey(0)
    kx, kg, kb, kqkv, kwo, kbo = jax.random.split(key, 6)

    ln_gamma = 1.0 + 0.1 * jax.random.normal(kg, (dim,), dtype=jnp.float32)
    ln_beta = 0.1 * jax.random.normal(kb, (dim,), dtype=jnp.float32)
    # Synthetic parameters stored as (in, out), i.e. W.T of nn.Linear
    w_qkv = 0.05 * jax.random.normal(kqkv, (dim, 3 * inner), dtype=jnp.float32)
    w_out = 0.05 * jax.random.normal(kwo, (inner, dim), dtype=jnp.float32)
    b_out = 0.05 * jax.random.normal(kbo, (dim,), dtype=jnp.float32)

    # B=2 (approx softmax recip) and B=4 (exact path; exercises bb > 1).
    for B, approx in ((2, True), (4, False)):
        x = jax.random.normal(jax.random.fold_in(kx, B), (B, N, dim), dtype=jnp.float32)
        y = prenorm_attention_pallas(x, ln_gamma, ln_beta, w_qkv, w_out, b_out,
                                     heads=heads, dim_head=dim_head,
                                     approx_softmax_recip=approx)
        y = jax.block_until_ready(y)
        y_ref = prenorm_attention_reference(x, ln_gamma, ln_beta, w_qkv, w_out, b_out,
                                            heads=heads, dim_head=dim_head)
        assert y.shape == (B, N, dim)
        assert jnp.allclose(y, y_ref, atol=2e-3, rtol=2e-3), f"mismatch vs reference (B={B})"

    print("KERNEL_OK")
</pallas_src>

<mosaic_0001>
module attributes {stable_mosaic.version = 11 : i64} {
  func.func @_prenorm_attention_kernel(%arg0: i32, %arg1: memref<16x32xf32, #tpu.memory_space<vmem>>, %arg2: memref<1x32xf32, #tpu.memory_space<vmem>>, %arg3: memref<1x32xf32, #tpu.memory_space<vmem>>, %arg4: memref<32x192xf32, #tpu.memory_space<vmem>>, %arg5: memref<64x32xf32, #tpu.memory_space<vmem>>, %arg6: memref<1x32xf32, #tpu.memory_space<vmem>>, %arg7: memref<16x32xf32, #tpu.memory_space<vmem>>, %arg8: memref<16x64xf32, #tpu.memory_space<vmem>>) attributes {dimension_semantics = [#tpu.dimension_semantics<arbitrary>], iteration_bounds = array<i64: 1>, scalar_prefetch = 0 : i64, scratch_operands = 1 : i64, tpu.core_type = #tpu.core_type<tc>, window_params = [{transform_indices = @transform_0, window_bounds = array<i64: 16, 32>}, {pipeline_mode = #tpu.pipeline_mode<synchronous>, transform_indices = @transform_1, window_bounds = array<i64: 1, 32>}, {pipeline_mode = #tpu.pipeline_mode<synchronous>, transform_indices = @transform_2, window_bounds = array<i64: 1, 32>}, {pipeline_mode = #tpu.pipeline_mode<synchronous>, transform_indices = @transform_3, window_bounds = array<i64: 32, 192>}, {pipeline_mode = #tpu.pipeline_mode<synchronous>, transform_indices = @transform_4, window_bounds = array<i64: 64, 32>}, {pipeline_mode = #tpu.pipeline_mode<synchronous>, transform_indices = @transform_5, window_bounds = array<i64: 1, 32>}, {transform_indices = @transform_6, window_bounds = array<i64: 16, 32>}]} {
    %c0 = arith.constant 0 : index
    %c0_0 = arith.constant 0 : index
    %0 = vector.load %arg1[%c0, %c0_0] : memref<16x32xf32, #tpu.memory_space<vmem>>, vector<16x32xf32>
    %cst = arith.constant dense<0.000000e+00> : vector<16xf32>
    %1 = vector.multi_reduction <add>, %0, %cst [1] : vector<16x32xf32> to vector<16xf32>
    %2 = vector.shape_cast %1 : vector<16xf32> to vector<16x1xf32>
    %cst_1 = arith.constant 3.200000e+01 : f32
    %3 = vector.broadcast %cst_1 : f32 to vector<16x1xf32>
    %4 = arith.divf %2, %3 : vector<16x1xf32>
    %5 = vector.broadcast %4 : vector<16x1xf32> to vector<16x32xf32>
    %6 = arith.subf %0, %5 : vector<16x32xf32>
    %7 = arith.mulf %6, %6 : vector<16x32xf32>
    %cst_2 = arith.constant dense<0.000000e+00> : vector<16xf32>
    %8 = vector.multi_reduction <add>, %7, %cst_2 [1] : vector<16x32xf32> to vector<16xf32>
    %9 = vector.shape_cast %8 : vector<16xf32> to vector<16x1xf32>
    %cst_3 = arith.constant 3.200000e+01 : f32
    %10 = vector.broadcast %cst_3 : f32 to vector<16x1xf32>
    %11 = arith.divf %9, %10 : vector<16x1xf32>
    %cst_4 = arith.constant 9.99999974E-6 : f32
    %12 = vector.broadcast %cst_4 : f32 to vector<16x1xf32>
    %13 = arith.addf %11, %12 : vector<16x1xf32>
    %14 = math.rsqrt %13 : vector<16x1xf32>
    %15 = vector.broadcast %14 : vector<16x1xf32> to vector<16x32xf32>
    %16 = arith.mulf %6, %15 : vector<16x32xf32>
    %c0_5 = arith.constant 0 : index
    %c0_6 = arith.constant 0 : index
    %17 = vector.load %arg2[%c0_5, %c0_6] : memref<1x32xf32, #tpu.memory_space<vmem>>, vector<1x32xf32>
    %18 = vector.broadcast %17 : vector<1x32xf32> to vector<16x32xf32>
    %19 = arith.mulf %16, %18 : vector<16x32xf32>
    %c0_7 = arith.constant 0 : index
    %c0_8 = arith.constant 0 : index
    %20 = vector.load %arg3[%c0_7, %c0_8] : memref<1x32xf32, #tpu.memory_space<vmem>>, vector<1x32xf32>
    %21 = vector.broadcast %20 : vector<1x32xf32> to vector<16x32xf32>
    %22 = arith.addf %19, %21 : vector<16x32xf32>
    %c0_9 = arith.constant 0 : index
    %c0_10 = arith.constant 0 : index
    %23 = vector.load %arg4[%c0_9, %c0_10] : memref<32x192xf32, #tpu.memory_space<vmem>>, vector<32x192xf32>
    %cst_11 = arith.constant dense<0.000000e+00> : vector<16x192xf32>
    %24 = tpu.matmul %22, %23, %cst_11 {dimension_numbers = #tpu.dot_dimension_numbers<[1], [0], [0], [1], [0, 0, 1, 1], [], []>} : vector<16x32xf32>, vector<32x192xf32>, vector<16x192xf32> -> vector<16x192xf32>
    %25 = vector.extract_strided_slice %24 {offsets = [0, 0], sizes = [8, 32], strides = [1, 1]} : vector<16x192xf32> to vector<8x32xf32>
    %26 = vector.extract_strided_slice %24 {offsets = [0, 64], sizes = [8, 32], strides = [1, 1]} : vector<16x192xf32> to vector<8x32xf32>
    %27 = vector.extract_strided_slice %24 {offsets = [0, 128], sizes = [8, 32], strides = [1, 1]} : vector<16x192xf32> to vector<8x32xf32>
    %cst_12 = arith.constant dense<0.000000e+00> : vector<8x8xf32>
    %28 = tpu.matmul %25, %26, %cst_12 {dimension_numbers = #tpu.dot_dimension_numbers<[1], [1], [0], [0], [0, 0, 1, 0], [], []>} : vector<8x32xf32>, vector<8x32xf32>, vector<8x8xf32> -> vector<8x8xf32>
    %cst_13 = arith.constant dense<0xFF800000> : vector<8xf32>
    %29 = vector.multi_reduction <maximumf>, %28, %cst_13 [1] : vector<8x8xf32> to vector<8xf32>
    %30 = vector.shape_cast %29 : vector<8xf32> to vector<8x1xf32>
    %31 = vector.broadcast %30 : vector<8x1xf32> to vector<8x8xf32>
    %32 = arith.subf %28, %31 : vector<8x8xf32>
    %33 = math.exp %32 : vector<8x8xf32>
    %cst_14 = arith.constant dense<0.000000e+00> : vector<8xf32>
    %34 = vector.multi_reduction <add>, %33, %cst_14 [1] : vector<8x8xf32> to vector<8xf32>
    %35 = vector.shape_cast %34 : vector<8xf32> to vector<8x1xf32>
    %36 = tpu.reciprocal %35 {approx = true} : vector<8x1xf32> -> vector<8x1xf32>
    %37 = vector.broadcast %36 : vector<8x1xf32> to vector<8x8xf32>
    %38 = arith.mulf %33, %37 : vector<8x8xf32>
    %cst_15 = arith.constant dense<0.000000e+00> : vector<8x32xf32>
    %39 = tpu.matmul %38, %27, %cst_15 {dimension_numbers = #tpu.dot_dimension_numbers<[1], [0], [0], [1], [0, 0, 1, 1], [], []>} : vector<8x8xf32>, vector<8x32xf32>, vector<8x32xf32> -> vector<8x32xf32>
    %c0_16 = arith.constant 0 : index
    %c0_17 = arith.constant 0 : index
    %40 = vector.load %arg8[%c0_16, %c0_17] : memref<16x64xf32, #tpu.memory_space<vmem>>, vector<8x32xf32>
    tpu.vector_store %arg8[%c0_16, %c0_17], %39 {strides = array<i32>} : memref<16x64xf32, #tpu.memory_space<vmem>>, vector<8x32xf32>,
    %41 = vector.extract_strided_slice %24 {offsets = [8, 0], sizes = [8, 32], strides = [1, 1]} : vector<16x192xf32> to vector<8x32xf32>
    %42 = vector.extract_strided_slice %24 {offsets = [8, 64], sizes = [8, 32], strides = [1, 1]} : vector<16x192xf32> to vector<8x32xf32>
    %43 = vector.extract_strided_slice %24 {offsets = [8, 128], sizes = [8, 32], strides = [1, 1]} : vector<16x192xf32> to vector<8x32xf32>
    %cst_18 = arith.constant dense<0.000000e+00> : vector<8x8xf32>
    %44 = tpu.matmul %41, %42, %cst_18 {dimension_numbers = #tpu.dot_dimension_numbers<[1], [1], [0], [0], [0, 0, 1, 0], [], []>} : vector<8x32xf32>, vector<8x32xf32>, vector<8x8xf32> -> vector<8x8xf32>
    %cst_19 = arith.constant dense<0xFF800000> : vector<8xf32>
    %45 = vector.multi_reduction <maximumf>, %44, %cst_19 [1] : vector<8x8xf32> to vector<8xf32>
    %46 = vector.shape_cast %45 : vector<8xf32> to vector<8x1xf32>
    %47 = vector.broadcast %46 : vector<8x1xf32> to vector<8x8xf32>
    %48 = arith.subf %44, %47 : vector<8x8xf32>
    %49 = math.exp %48 : vector<8x8xf32>
    %cst_20 = arith.constant dense<0.000000e+00> : vector<8xf32>
    %50 = vector.multi_reduction <add>, %49, %cst_20 [1] : vector<8x8xf32> to vector<8xf32>
    %51 = vector.shape_cast %50 : vector<8xf32> to vector<8x1xf32>
    %52 = tpu.reciprocal %51 {approx = true} : vector<8x1xf32> -> vector<8x1xf32>
    %53 = vector.broadcast %52 : vector<8x1xf32> to vector<8x8xf32>
    %54 = arith.mulf %49, %53 : vector<8x8xf32>
    %cst_21 = arith.constant dense<0.000000e+00> : vector<8x32xf32>
    %55 = tpu.matmul %54, %43, %cst_21 {dimension_numbers = #tpu.dot_dimension_numbers<[1], [0], [0], [1], [0, 0, 1, 1], [], []>} : vector<8x8xf32>, vector<8x32xf32>, vector<8x32xf32> -> vector<8x32xf32>
    %c8 = arith.constant 8 : index
    %c0_22 = arith.constant 0 : index
    %56 = vector.load %arg8[%c8, %c0_22] : memref<16x64xf32, #tpu.memory_space<vmem>>, vector<8x32xf32>
    tpu.vector_store %arg8[%c8, %c0_22], %55 {strides = array<i32>} : memref<16x64xf32, #tpu.memory_space<vmem>>, vector<8x32xf32>,
    %57 = vector.extract_strided_slice %24 {offsets = [0, 32], sizes = [8, 32], strides = [1, 1]} : vector<16x192xf32> to vector<8x32xf32>
    %58 = vector.extract_strided_slice %24 {offsets = [0, 96], sizes = [8, 32], strides = [1, 1]} : vector<16x192xf32> to vector<8x32xf32>
    %59 = vector.extract_strided_slice %24 {offsets = [0, 160], sizes = [8, 32], strides = [1, 1]} : vector<16x192xf32> to vector<8x32xf32>
    %cst_23 = arith.constant dense<0.000000e+00> : vector<8x8xf32>
    %60 = tpu.matmul %57, %58, %cst_23 {dimension_numbers = #tpu.dot_dimension_numbers<[1], [1], [0], [0], [0, 0, 1, 0], [], []>} : vector<8x32xf32>, vector<8x32xf32>, vector<8x8xf32> -> vector<8x8xf32>
    %cst_24 = arith.constant dense<0xFF800000> : vector<8xf32>
    %61 = vector.multi_reduction <maximumf>, %60, %cst_24 [1] : vector<8x8xf32> to vector<8xf32>
    %62 = vector.shape_cast %61 : vector<8xf32> to vector<8x1xf32>
    %63 = vector.broadcast %62 : vector<8x1xf32> to vector<8x8xf32>
    %64 = arith.subf %60, %63 : vector<8x8xf32>
    %65 = math.exp %64 : vector<8x8xf32>
    %cst_25 = arith.constant dense<0.000000e+00> : vector<8xf32>
    %66 = vector.multi_reduction <add>, %65, %cst_25 [1] : vector<8x8xf32> to vector<8xf32>
    %67 = vector.shape_cast %66 : vector<8xf32> to vector<8x1xf32>
    %68 = tpu.reciprocal %67 {approx = true} : vector<8x1xf32> -> vector<8x1xf32>
    %69 = vector.broadcast %68 : vector<8x1xf32> to vector<8x8xf32>
    %70 = arith.mulf %65, %69 : vector<8x8xf32>
    %cst_26 = arith.constant dense<0.000000e+00> : vector<8x32xf32>
    %71 = tpu.matmul %70, %59, %cst_26 {dimension_numbers = #tpu.dot_dimension_numbers<[1], [0], [0], [1], [0, 0, 1, 1], [], []>} : vector<8x8xf32>, vector<8x32xf32>, vector<8x32xf32> -> vector<8x32xf32>
    %c0_27 = arith.constant 0 : index
    %c32 = arith.constant 32 : index
    %72 = vector.load %arg8[%c0_27, %c32] : memref<16x64xf32, #tpu.memory_space<vmem>>, vector<8x32xf32>
    tpu.vector_store %arg8[%c0_27, %c32], %71 {strides = array<i32>} : memref<16x64xf32, #tpu.memory_space<vmem>>, vector<8x32xf32>,
    %73 = vector.extract_strided_slice %24 {offsets = [8, 32], sizes = [8, 32], strides = [1, 1]} : vector<16x192xf32> to vector<8x32xf32>
    %74 = vector.extract_strided_slice %24 {offsets = [8, 96], sizes = [8, 32], strides = [1, 1]} : vector<16x192xf32> to vector<8x32xf32>
    %75 = vector.extract_strided_slice %24 {offsets = [8, 160], sizes = [8, 32], strides = [1, 1]} : vector<16x192xf32> to vector<8x32xf32>
    %cst_28 = arith.constant dense<0.000000e+00> : vector<8x8xf32>
    %76 = tpu.matmul %73, %74, %cst_28 {dimension_numbers = #tpu.dot_dimension_numbers<[1], [1], [0], [0], [0, 0, 1, 0], [], []>} : vector<8x32xf32>, vector<8x32xf32>, vector<8x8xf32> -> vector<8x8xf32>
    %cst_29 = arith.constant dense<0xFF800000> : vector<8xf32>
    %77 = vector.multi_reduction <maximumf>, %76, %cst_29 [1] : vector<8x8xf32> to vector<8xf32>
    %78 = vector.shape_cast %77 : vector<8xf32> to vector<8x1xf32>
    %79 = vector.broadcast %78 : vector<8x1xf32> to vector<8x8xf32>
    %80 = arith.subf %76, %79 : vector<8x8xf32>
    %81 = math.exp %80 : vector<8x8xf32>
    %cst_30 = arith.constant dense<0.000000e+00> : vector<8xf32>
    %82 = vector.multi_reduction <add>, %81, %cst_30 [1] : vector<8x8xf32> to vector<8xf32>
    %83 = vector.shape_cast %82 : vector<8xf32> to vector<8x1xf32>
    %84 = tpu.reciprocal %83 {approx = true} : vector<8x1xf32> -> vector<8x1xf32>
    %85 = vector.broadcast %84 : vector<8x1xf32> to vector<8x8xf32>
    %86 = arith.mulf %81, %85 : vector<8x8xf32>
    %cst_31 = arith.constant dense<0.000000e+00> : vector<8x32xf32>
    %87 = tpu.matmul %86, %75, %cst_31 {dimension_numbers = #tpu.dot_dimension_numbers<[1], [0], [0], [1], [0, 0, 1, 1], [], []>} : vector<8x8xf32>, vector<8x32xf32>, vector<8x32xf32> -> vector<8x32xf32>
    %c8_32 = arith.constant 8 : index
    %c32_33 = arith.constant 32 : index
    %88 = vector.load %arg8[%c8_32, %c32_33] : memref<16x64xf32, #tpu.memory_space<vmem>>, vector<8x32xf32>
    tpu.vector_store %arg8[%c8_32, %c32_33], %87 {strides = array<i32>} : memref<16x64xf32, #tpu.memory_space<vmem>>, vector<8x32xf32>,
    %c0_34 = arith.constant 0 : index
    %c0_35 = arith.constant 0 : index
    %89 = vector.load %arg8[%c0_34, %c0_35] : memref<16x64xf32, #tpu.memory_space<vmem>>, vector<16x64xf32>
    %c0_36 = arith.constant 0 : index
    %c0_37 = arith.constant 0 : index
    %90 = vector.load %arg5[%c0_36, %c0_37] : memref<64x32xf32, #tpu.memory_space<vmem>>, vector<64x32xf32>
    %cst_38 = arith.constant dense<0.000000e+00> : vector<16x32xf32>
    %91 = tpu.matmul %89, %90, %cst_38 {dimension_numbers = #tpu.dot_dimension_numbers<[1], [0], [0], [1], [0, 0, 1, 1], [], []>} : vector<16x64xf32>, vector<64x32xf32>, vector<16x32xf32> -> vector<16x32xf32>
    %c0_39 = arith.constant 0 : index
    %c0_40 = arith.constant 0 : index
    %92 = vector.load %arg6[%c0_39, %c0_40] : memref<1x32xf32, #tpu.memory_space<vmem>>, vector<1x32xf32>
    %93 = vector.broadcast %92 : vector<1x32xf32> to vector<16x32xf32>
    %94 = arith.addf %91, %93 : vector<16x32xf32>
    %c0_41 = arith.constant 0 : index
    %c0_42 = arith.constant 0 : index
    %95 = vector.load %arg7[%c0_41, %c0_42] : memref<16x32xf32, #tpu.memory_space<vmem>>, vector<16x32xf32>
    tpu.vector_store %arg7[%c0_41, %c0_42], %94 {strides = array<i32>} : memref<16x32xf32, #tpu.memory_space<vmem>>, vector<16x32xf32>,
    return
  }
  func.func @transform_0(%arg0: i32) -> (i32, i32) {
    %c0_i32 = arith.constant 0 : i32
    %c0_i32_0 = arith.constant 0 : i32
    return %arg0, %c0_i32 : i32, i32
  }
  func.func @transform_1(%arg0: i32) -> (i32, i32) {
    %c0_i32 = arith.constant 0 : i32
    %c0_i32_0 = arith.constant 0 : i32
    %c0_i32_1 = arith.constant 0 : i32
    return %c0_i32, %c0_i32_0 : i32, i32
  }
  func.func @transform_2(%arg0: i32) -> (i32, i32) {
    %c0_i32 = arith.constant 0 : i32
    %c0_i32_0 = arith.constant 0 : i32
    %c0_i32_1 = arith.constant 0 : i32
    return %c0_i32, %c0_i32_0 : i32, i32
  }
  func.func @transform_3(%arg0: i32) -> (i32, i32) {
    %c0_i32 = arith.constant 0 : i32
    %c0_i32_0 = arith.constant 0 : i32
    %c0_i32_1 = arith.constant 0 : i32
    return %c0_i32, %c0_i32_0 : i32, i32
  }
  func.func @transform_4(%arg0: i32) -> (i32, i32) {
    %c0_i32 = arith.constant 0 : i32
    %c0_i32_0 = arith.constant 0 : i32
    %c0_i32_1 = arith.constant 0 : i32
    return %c0_i32, %c0_i32_0 : i32, i32
  }
  func.func @transform_5(%arg0: i32) -> (i32, i32) {
    %c0_i32 = arith.constant 0 : i32
    %c0_i32_0 = arith.constant 0 : i32
    %c0_i32_1 = arith.constant 0 : i32
    return %c0_i32, %c0_i32_0 : i32, i32
  }
  func.func @transform_6(%arg0: i32) -> (i32, i32) {
    %c0_i32 = arith.constant 0 : i32
    %c0_i32_0 = arith.constant 0 : i32
    return %arg0, %c0_i32 : i32, i32
  }
}

</mosaic_0001>

<llo_original>
// kernel: tpu_custom_call.1
$region0: #{tpu_custom_call.1}
  #allocation0 [shape = 'u32[]', space=smem, size = 0x4, offset = 0x4, fixed_abs, tag = 'smem constant byte address 0x4 - core index']
  #allocation1 [shape = 'u32[144,128]{1,0:T(1,128)}', space=vmem, size = 0x12000, scoped, tag = 'internal scratch']
  #allocation2 [shape = 'f32[16,64]{1,0:T(8,128)}', space=vmem, size = 0x2000, scoped, tag = 'scratch operand']
  %s0 = inlined_call_operand.vmem [shape: f32[16,32], index: 0, kind: input, shape index: {}]
  %s1 = inlined_call_operand.vmem [shape: f32[1,32], index: 1, kind: input, shape index: {}]
  %s2 = inlined_call_operand.vmem [shape: f32[1,32], index: 2, kind: input, shape index: {}]
  %s3 = inlined_call_operand.vmem [shape: f32[32,192], index: 3, kind: input, shape index: {}]
  %s4 = inlined_call_operand.vmem [shape: f32[64,32], index: 4, kind: input, shape index: {}]
  %s5 = inlined_call_operand.vmem [shape: f32[1,32], index: 5, kind: input, shape index: {}]
  %s6 = inlined_call_operand.hbm [shape: f32[16,32], index: 6, kind: output, shape index: {}]
  %s7 = sld [smem:[#allocation0]]
  $region34: #{tpu_custom_call.1} parent=0
    _
  %s9 = ssub.s32 1, %s7
  %s10 = scalar_select 0, %s9, %s7
  $region1: #{tpu_custom_call.1} parent=0
    #allocation3 [shape = 'u8[8192]{0}', space=vmem, size = 0x2000, scoped, tag = 'output window, operand 0, single buffered']
    #allocation4 [shape = 's32[1]{0}', space=sflag, size = 0x4, scoped, tag = 'scoped memory for tpu_custom_call.1']
    %11 = vsyncpa [#allocation4], 0
    // Predicated region
    $region2: #{tpu_custom_call.1} parent=1 // pred_check
      _
    $region3: #{tpu_custom_call.1} parent=1 // pred_check_branch
      %13 = sbr.rel (0) target = $region5
    $region4: #{tpu_custom_call.1} parent=1 // pred_region
      _
    $region5: #{tpu_custom_call.1} parent=1 // pred_fallthru
      _
    // Predicated region
    $region6: #{tpu_custom_call.1} parent=1 // pred_check
      _
    $region7: #{tpu_custom_call.1} parent=1 // pred_check_branch
      %15 = sbr.rel (0) target = $region9
    $region8: #{tpu_custom_call.1} parent=1 // pred_region
      _
    $region9: #{tpu_custom_call.1} parent=1 // pred_fallthru
      _
    // Predicated region
    $region10: #{tpu_custom_call.1} parent=1 // pred_check
      _
    $region11: #{tpu_custom_call.1} parent=1 // pred_check_branch
      %17 = sbr.rel (0) target = $region13
    $region12: #{tpu_custom_call.1} parent=1 // pred_region
      _
    $region13: #{tpu_custom_call.1} parent=1 // pred_fallthru
      _
    // Predicated region
    $region14: #{tpu_custom_call.1} parent=1 // pred_check
      _
    $region15: #{tpu_custom_call.1} parent=1 // pred_check_branch
      %19 = sbr.rel (0) target = $region17
    $region16: #{tpu_custom_call.1} parent=1 // pred_region
      _
    $region17: #{tpu_custom_call.1} parent=1 // pred_fallthru
      _
    // Predicated region
    $region18: #{tpu_custom_call.1} parent=1 // pred_check
      _
    $region19: #{tpu_custom_call.1} parent=1 // pred_check_branch
      %21 = sbr.rel (0) target = $region21
    $region20: #{tpu_custom_call.1} parent=1 // pred_region
      _
    $region21: #{tpu_custom_call.1} parent=1 // pred_fallthru
      _
    // Predicated region
    $region22: #{tpu_custom_call.1} parent=1 // pred_check
      _
    $region23: #{tpu_custom_call.1} parent=1 // pred_check_branch
      %23 = sbr.rel (0) target = $region25
    $region24: #{tpu_custom_call.1} parent=1 // pred_region
      _
    $region25: #{tpu_custom_call.1} parent=1 // pred_fallthru
      _
    %v24 = vld [vmem:[%s0] sm:$0xff]
    %v25 = vld [vmem:[%s0 + $0x8] sm:$0xff]
    %vm26 = vcmask 261120
    %v27 = vsel %vm26, %v24, 0.0
    %28 = vadd.xlane.f32.xlu0 %v27
    %v29 = vpop.xlane.xlu0 %28
    %v30 = vsel %vm26, %v25, 0.0
    %31 = vadd.xlane.f32.xlu0 %v30
    %v32 = vpop.xlane.xlu0 %31
    %v33 = vrcp.pop 32.0
    %v34 = vmul.f32 %v29, %v33
    %v35 = vmul.f32 %v32, %v33
    %v36 = vsub.f32 %v24, %v34
    %v37 = vsub.f32 %v25, %v35
    %v38 = vmul.f32 %v36, %v36
    %v39 = vmul.f32 %v37, %v37
    %v40 = vsel %vm26, %v38, 0.0
    %41 = vadd.xlane.f32.xlu0 %v40
    %v42 = vpop.xlane.xlu0 %41
    %v43 = vsel %vm26, %v39, 0.0
    %44 = vadd.xlane.f32.xlu0 %v43
    %v45 = vpop.xlane.xlu0 %44
    %v46 = vmul.f32 %v42, %v33
    %v47 = vmul.f32 %v45, %v33
    %v48 = vadd.f32 %v46, 1e-05
    %v49 = vadd.f32 %v47, 1e-05
    %v50 = vrsqrt.pop %v48
    %v51 = vrsqrt.pop %v49
    %v52 = vmul.f32 %v36, %v50
    %v53 = vmul.f32 %v37, %v51
    %v54 = vld [vmem:[%s1] sm:$0x1]
    %v56 = vlaneseq
    %v57 = vshrl.u32 %v56, 7
    %v58 = vsub.s32 0, %v57
    %v59 = vrot.slane %v54, %v58
    %v61 = vmul.f32 %v52, %v59
    %v62 = vmul.f32 %v53, %v59
    %v63 = vld [vmem:[%s2] sm:$0x1]
    %v65 = vlaneseq
    %v66 = vshrl.u32 %v65, 7
    %v67 = vsub.s32 0, %v66
    %v68 = vrot.slane %v63, %v67
    %v70 = vadd.f32 %v61, %v68
    %v71 = vadd.f32 %v62, %v68
    %v72 = vld [vmem:[%s3] sm:$0xff]
    %v73 = vld [vmem:[%s3 + $0x8] sm:$0xff]
    %v74 = vld [vmem:[%s3 + $0x10] sm:$0xff]
    %v75 = vld [vmem:[%s3 + $0x18] sm:$0xff]
    %v76 = vld [vmem:[%s3 + $0x20] sm:$0xff]
    %v77 = vld [vmem:[%s3 + $0x28] sm:$0xff]
    %v78 = vld [vmem:[%s3 + $0x30] sm:$0xff]
    %v79 = vld [vmem:[%s3 + $0x38] sm:$0xff]
    %v81 = vsel %vm26, %v70, 0
    %v84 = vsel %vm26, %v71, 0
    %86 = vmatprep.subr.mxu0 %v73
    %87 = vmatpush1.msra.mxu0 %v72
    %88 = vmatprep.subr.mxu0 %v75
    %89 = vmatpush1.msra.mxu0 %v74
    %90 = vmatprep.subr.mxu0 %v77
    %91 = vmatpush1.msra.mxu0 %v76
    %92 = vmatprep.subr.mxu0 %v79
    %93 = vmatpush1.msra.mxu0 %v78
    %94 = vmatprep.subr.mxu0 0.0
    %95 = vmatpush1.msra.mxu0 0.0
    %96 = vmatprep.subr.mxu0 0.0
    %97 = vmatpush1.msra.mxu0 0.0
    %98 = vmatprep.subr.mxu0 0.0
    %99 = vmatpush1.msra.mxu0 0.0
    %100 = vmatprep.subr.mxu0 0.0
    %101 = vmatpush1.msra.mxu0 0.0
    %102 = vmatprep.subr.mxu0 0.0
    %103 = vmatpush1.msra.mxu0 0.0
    %104 = vmatprep.subr.mxu0 0.0
    %105 = vmatpush1.msra.mxu0 0.0
    %106 = vmatprep.subr.mxu0 0.0
    %107 = vmatpush1.msra.mxu0 0.0
    %108 = vmatprep.subr.mxu0 0.0
    %109 = vmatpush1.msra.mxu0 0.0
    %110 = vmatprep.subr.mxu0 0.0
    %111 = vmatpush1.msra.mxu0 0.0
    %112 = vmatprep.subr.mxu0 0.0
    %113 = vmatpush1.msra.mxu0 0.0
    %114 = vmatprep.subr.mxu0 0.0
    %115 = vmatpush1.msra.mxu0 0.0
    %116 = vmatprep.subr.mxu0 0.0
    %117 = vmatpush1.msra.mxu0 0.0
    %118 = vmatprep.subr.mxu0 0.0
    %119 = vmatpush1.msra.mxu0 0.0
    %120 = vmatprep.subr.mxu0 0.0
    %121 = vmatpush1.msra.mxu0 0.0
    %122 = vmatprep.subr.mxu0 0.0
    %123 = vmatpush1.msra.mxu0 0.0
    %124 = vmatprep.subr.mxu0 0.0
    %125 = vmatpush1.msra.mxu0 0.0
    %126 = vmatprep.subr.mxu0 0.0
    %127 = vmatpush1.msra.mxu0 0.0
    %128 = vmatprep.subr.mxu0 0.0
    %129 = vmatpush1.msra.mxu0 0.0
    %130 = vmatprep.subr.mxu0 0.0
    %131 = vmatpush1.msra.mxu0 0.0
    %132 = vmatprep.subr.mxu0 0.0
    %133 = vmatpush1.msra.mxu0 0.0
    %134 = vmatprep.subr.mxu0 0.0
    %135 = vmatpush1.msra.mxu0 0.0
    %136 = vmatprep.subr.mxu0 0.0
    %137 = vmatpush1.msra.mxu0 0.0
    %138 = vmatprep.subr.mxu0 0.0
    %139 = vmatpush1.msra.mxu0 0.0
    %140 = vmatprep.subr.mxu0 0.0
    %141 = vmatpush1.msra.mxu0 0.0
    %142 = vmatprep.subr.mxu0 0.0
    %143 = vmatpush1.msra.mxu0 0.0
    %144 = vmatprep.subr.mxu0 0.0
    %145 = vmatpush1.msra.mxu0 0.0
    %146 = vmatprep.subr.mxu0 0.0
    %147 = vmatpush1.msra.mxu0 0.0
    %148 = vmatprep.subr.mxu0 0.0
    %149 = vmatpush1.msra.mxu0 0.0
    %150 = vmatprep.mubr.f32.mxu0 0.0
    %151 = vmatmul.mubr.f32.gmra.mrb[0].mxu0 %v81
    %v152 = vpop.f32.mrb[0].mxu0
    %v153 = vadd.f32 0.0, %v152
    %v154 = vpop.f32.mrb[0].mxu0
    %v155 = vadd.f32 0.0, %v154
    %156 = vmatprep.mubr.f32.mxu0 0.0
    %157 = vmatmul.mubr.f32.gmra.mrb[0].mxu0 %v84
    %v158 = vpop.f32.mrb[0].mxu0
    %v159 = vadd.f32 0.0, %v158
    %v160 = vpop.f32.mrb[0].mxu0
    %v161 = vadd.f32 0.0, %v160
    %162 = vdwg.mxu0
    %164 = vrot.lane.b32.xlu0 %v153, 64
    %v165 = vpop.permute.xlu0 %164
    %v166 = vsel %vm26, %v153, 0
    %v168 = vsel %vm26, %v165, 0
    %170 = vmatprep.subr.mxu0 0.0
    %171 = vmatpush1.xpose.msra.mxu0 %v168
    %172 = vmatprep.subr.mxu0 0.0
    %173 = vmatpush1.xpose.msra.mxu0 0.0
    %174 = vmatprep.subr.mxu0 0.0
    %175 = vmatpush1.xpose.msra.mxu0 0.0
    %176 = vmatprep.subr.mxu0 0.0
    %177 = vmatpush1.xpose.msra.mxu0 0.0
    %178 = vmatprep.subr.mxu0 0.0
    %179 = vmatpush1.xpose.msra.mxu0 0.0
    %180 = vmatprep.subr.mxu0 0.0
    %181 = vmatpush1.xpose.msra.mxu0 0.0
    %182 = vmatprep.subr.mxu0 0.0
    %183 = vmatpush1.xpose.msra.mxu0 0.0
    %184 = vmatprep.subr.mxu0 0.0
    %185 = vmatpush1.xpose.msra.mxu0 0.0
    %186 = vmatprep.subr.mxu0 0.0
    %187 = vmatpush1.xpose.msra.mxu0 0.0
    %188 = vmatprep.subr.mxu0 0.0
    %189 = vmatpush1.xpose.msra.mxu0 0.0
    %190 = vmatprep.subr.mxu0 0.0
    %191 = vmatpush1.xpose.msra.mxu0 0.0
    %192 = vmatprep.subr.mxu0 0.0
    %193 = vmatpush1.xpose.msra.mxu0 0.0
    %194 = vmatprep.subr.mxu0 0.0
    %195 = vmatpush1.xpose.msra.mxu0 0.0
    %196 = vmatprep.subr.mxu0 0.0
    %197 = vmatpush1.xpose.msra.mxu0 0.0
    %198 = vmatprep.subr.mxu0 0.0
    %199 = vmatpush1.xpose.msra.mxu0 0.0
    %200 = vmatprep.subr.mxu0 0.0
    %201 = vmatpush1.xpose.msra.mxu0 0.0
    %202 = vmatprep.subr.mxu0 0.0
    %203 = vmatpush1.xpose.msra.mxu0 0.0
    %204 = vmatprep.subr.mxu0 0.0
    %205 = vmatpush1.xpose.msra.mxu0 0.0
    %206 = vmatprep.subr.mxu0 0.0
    %207 = vmatpush1.xpose.msra.mxu0 0.0
    %208 = vmatprep.subr.mxu0 0.0
    %209 = vmatpush1.xpose.msra.mxu0 0.0
    %210 = vmatprep.subr.mxu0 0.0
    %211 = vmatpush1.xpose.msra.mxu0 0.0
    %212 = vmatprep.subr.mxu0 0.0
    %213 = vmatpush1.xpose.msra.mxu0 0.0
    %214 = vmatprep.subr.mxu0 0.0
    %215 = vmatpush1.xpose.msra.mxu0 0.0
    %216 = vmatprep.subr.mxu0 0.0
    %217 = vmatpush1.xpose.msra.mxu0 0.0
    %218 = vmatprep.subr.mxu0 0.0
    %219 = vmatpush1.xpose.msra.mxu0 0.0
    %220 = vmatprep.subr.mxu0 0.0
    %221 = vmatpush1.xpose.msra.mxu0 0.0
    %222 = vmatprep.subr.mxu0 0.0
    %223 = vmatpush1.xpose.msra.mxu0 0.0
    %224 = vmatprep.subr.mxu0 0.0
    %225 = vmatpush1.xpose.msra.mxu0 0.0
    %226 = vmatprep.subr.mxu0 0.0
    %227 = vmatpush1.xpose.msra.mxu0 0.0
    %228 = vmatprep.subr.mxu0 0.0
    %229 = vmatpush1.xpose.msra.mxu0 0.0
    %230 = vmatprep.subr.mxu0 0.0
    %231 = vmatpush1.xpose.msra.mxu0 0.0
    %232 = vmatprep.subr.mxu0 0.0
    %233 = vmatpush1.xpose.msra.mxu0 0.0
    %234 = vmatprep.mubr.f32.mxu0 0.0
    %235 = vmatmul.mubr.f32.gmra.mrb[0].mxu0 %v166
    %v236 = vpop.f32.mrb[0].mxu0
    %v237 = vadd.f32 0.0, %v236
    %v238 = vpop.f32.mrb[0].mxu0
    %239 = vdwg.mxu0
    %vm240 = vcmask 64512
    %v241 = vsel %vm240, %v237, -inf
    %242 = vmax.xlane.f32.xlu0 %v241
    %v243 = vpop.xlane.xlu0 %242
    %v244 = vsub.f32 %v237, %v243
    %v245 = vmul.f32 %v244, 1.442695
    %v246 = vpow.pop %v245
    %v247 = vsel %vm240, %v246, 0.0
    %248 = vadd.xlane.f32.xlu0 %v247
    %v249 = vpop.xlane.xlu0 %248
    %v250 = vrcp.pop %v249
    %v251 = vmul.f32 %v246, %v250
    %v253 = vsel %vm240, %v251, 0
    %255 = vmatprep.subr.mxu0 0.0
    %256 = vmatpush1.msra.mxu0 %v155
    %257 = vmatprep.subr.mxu0 0.0
    %258 = vmatpush1.msra.mxu0 0.0
    %259 = vmatprep.subr.mxu0 0.0
    %260 = vmatpush1.msra.mxu0 0.0
    %261 = vmatprep.subr.mxu0 0.0
    %262 = vmatpush1.msra.mxu0 0.0
    %263 = vmatprep.subr.mxu0 0.0
    %264 = vmatpush1.msra.mxu0 0.0
    %265 = vmatprep.subr.mxu0 0.0
    %266 = vmatpush1.msra.mxu0 0.0
    %267 = vmatprep.subr.mxu0 0.0
    %268 = vmatpush1.msra.mxu0 0.0
    %269 = vmatprep.subr.mxu0 0.0
    %270 = vmatpush1.msra.mxu0 0.0
    %271 = vmatprep.subr.mxu0 0.0
    %272 = vmatpush1.msra.mxu0 0.0
    %273 = vmatprep.subr.mxu0 0.0
    %274 = vmatpush1.msra.mxu0 0.0
    %275 = vmatprep.subr.mxu0 0.0
    %276 = vmatpush1.msra.mxu0 0.0
    %277 = vmatprep.subr.mxu0 0.0
    %278 = vmatpush1.msra.mxu0 0.0
    %279 = vmatprep.subr.mxu0 0.0
    %280 = vmatpush1.msra.mxu0 0.0
    %281 = vmatprep.subr.mxu0 0.0
    %282 = vmatpush1.msra.mxu0 0.0
    %283 = vmatprep.subr.mxu0 0.0
    %284 = vmatpush1.msra.mxu0 0.0
    %285 = vmatprep.subr.mxu0 0.0
    %286 = vmatpush1.msra.mxu0 0.0
    %287 = vmatprep.subr.mxu0 0.0
    %288 = vmatpush1.msra.mxu0 0.0
    %289 = vmatprep.subr.mxu0 0.0
    %290 = vmatpush1.msra.mxu0 0.0
    %291 = vmatprep.subr.mxu0 0.0
    %292 = vmatpush1.msra.mxu0 0.0
    %293 = vmatprep.subr.mxu0 0.0
    %294 = vmatpush1.msra.mxu0 0.0
    %295 = vmatprep.subr.mxu0 0.0
    %296 = vmatpush1.msra.mxu0 0.0
    %297 = vmatprep.subr.mxu0 0.0
    %298 = vmatpush1.msra.mxu0 0.0
    %299 = vmatprep.subr.mxu0 0.0
    %300 = vmatpush1.msra.mxu0 0.0
    %301 = vmatprep.subr.mxu0 0.0
    %302 = vmatpush1.msra.mxu0 0.0
    %303 = vmatprep.subr.mxu0 0.0
    %304 = vmatpush1.msra.mxu0 0.0
    %305 = vmatprep.subr.mxu0 0.0
    %306 = vmatpush1.msra.mxu0 0.0
    %307 = vmatprep.subr.mxu0 0.0
    %308 = vmatpush1.msra.mxu0 0.0
    %309 = vmatprep.subr.mxu0 0.0
    %310 = vmatpush1.msra.mxu0 0.0
    %311 = vmatprep.subr.mxu0 0.0
    %312 = vmatpush1.msra.mxu0 0.0
    %313 = vmatprep.subr.mxu0 0.0
    %314 = vmatpush1.msra.mxu0 0.0
    %315 = vmatprep.subr.mxu0 0.0
    %316 = vmatpush1.msra.mxu0 0.0
    %317 = vmatprep.subr.mxu0 0.0
    %318 = vmatpush1.msra.mxu0 0.0
    %319 = vmatprep.mubr.f32.mxu0 0.0
    %320 = vmatmul.mubr.f32.gmra.mrb[0].mxu0 %v253
    %v321 = vpop.f32.mrb[0].mxu0
    %v322 = vadd.f32 0.0, %v321
    %v323 = vpop.f32.mrb[0].mxu0
    %324 = vdwg.mxu0
    %325 = vst.msk [vmem:[#allocation2] sm:$0xff] %vm26, %v322
    %327 = vrot.lane.b32.xlu0 %v159, 64
    %v328 = vpop.permute.xlu0 %327
    %v329 = vsel %vm26, %v159, 0
    %v331 = vsel %vm26, %v328, 0
    %333 = vmatprep.subr.mxu0 0.0
    %334 = vmatpush1.xpose.msra.mxu0 %v331
    %335 = vmatprep.subr.mxu0 0.0
    %336 = vmatpush1.xpose.msra.mxu0 0.0
    %337 = vmatprep.subr.mxu0 0.0
    %338 = vmatpush1.xpose.msra.mxu0 0.0
    %339 = vmatprep.subr.mxu0 0.0
    %340 = vmatpush1.xpose.msra.mxu0 0.0
    %341 = vmatprep.subr.mxu0 0.0
    %342 = vmatpush1.xpose.msra.mxu0 0.0
    %343 = vmatprep.subr.mxu0 0.0
    %344 = vmatpush1.xpose.msra.mxu0 0.0
    %345 = vmatprep.subr.mxu0 0.0
    %346 = vmatpush1.xpose.msra.mxu0 0.0
    %347 = vmatprep.subr.mxu0 0.0
    %348 = vmatpush1.xpose.msra.mxu0 0.0
    %349 = vmatprep.subr.mxu0 0.0
    %350 = vmatpush1.xpose.msra.mxu0 0.0
    %351 = vmatprep.subr.mxu0 0.0
    %352 = vmatpush1.xpose.msra.mxu0 0.0
    %353 = vmatprep.subr.mxu0 0.0
    %354 = vmatpush1.xpose.msra.mxu0 0.0
    %355 = vmatprep.subr.mxu0 0.0
    %356 = vmatpush1.xpose.msra.mxu0 0.0
    %357 = vmatprep.subr.mxu0 0.0
    %358 = vmatpush1.xpose.msra.mxu0 0.0
    %359 = vmatprep.subr.mxu0 0.0
    %360 = vmatpush1.xpose.msra.mxu0 0.0
    %361 = vmatprep.subr.mxu0 0.0
    %362 = vmatpush1.xpose.msra.mxu0 0.0
    %363 = vmatprep.subr.mxu0 0.0
    %364 = vmatpush1.xpose.msra.mxu0 0.0
    %365 = vmatprep.subr.mxu0 0.0
    %366 = vmatpush1.xpose.msra.mxu0 0.0
    %367 = vmatprep.subr.mxu0 0.0
    %368 = vmatpush1.xpose.msra.mxu0 0.0
    %369 = vmatprep.subr.mxu0 0.0
    %370 = vmatpush1.xpose.msra.mxu0 0.0
    %371 = vmatprep.subr.mxu0 0.0
    %372 = vmatpush1.xpose.msra.mxu0 0.0
    %373 = vmatprep.subr.mxu0 0.0
    %374 = vmatpush1.xpose.msra.mxu0 0.0
    %375 = vmatprep.subr.mxu0 0.0
    %376 = vmatpush1.xpose.msra.mxu0 0.0
    %377 = vmatprep.subr.mxu0 0.0
    %378 = vmatpush1.xpose.msra.mxu0 0.0
    %379 = vmatprep.subr.mxu0 0.0
    %380 = vmatpush1.xpose.msra.mxu0 0.0
    %381 = vmatprep.subr.mxu0 0.0
    %382 = vmatpush1.xpose.msra.mxu0 0.0
    %383 = vmatprep.subr.mxu0 0.0
    %384 = vmatpush1.xpose.msra.mxu0 0.0
    %385 = vmatprep.subr.mxu0 0.0
    %386 = vmatpush1.xpose.msra.mxu0 0.0
    %387 = vmatprep.subr.mxu0 0.0
    %388 = vmatpush1.xpose.msra.mxu0 0.0
    %389 = vmatprep.subr.mxu0 0.0
    %390 = vmatpush1.xpose.msra.mxu0 0.0
    %391 = vmatprep.subr.mxu0 0.0
    %392 = vmatpush1.xpose.msra.mxu0 0.0
    %393 = vmatprep.subr.mxu0 0.0
    %394 = vmatpush1.xpose.msra.mxu0 0.0
    %395 = vmatprep.subr.mxu0 0.0
    %396 = vmatpush1.xpose.msra.mxu0 0.0
    %397 = vmatprep.mubr.f32.mxu0 0.0
    %398 = vmatmul.mubr.f32.gmra.mrb[0].mxu0 %v329
    %v399 = vpop.f32.mrb[0].mxu0
    %v400 = vadd.f32 0.0, %v399
    %v401 = vpop.f32.mrb[0].mxu0
    %402 = vdwg.mxu0
    %v403 = vsel %vm240, %v400, -inf
    %404 = vmax.xlane.f32.xlu0 %v403
    %v405 = vpop.xlane.xlu0 %404
    %v406 = vsub.f32 %v400, %v405
    %v407 = vmul.f32 %v406, 1.442695
    %v408 = vpow.pop %v407
    %v409 = vsel %vm240, %v408, 0.0
    %410 = vadd.xlane.f32.xlu0 %v409
    %v411 = vpop.xlane.xlu0 %410
    %v412 = vrcp.pop %v411
    %v413 = vmul.f32 %v408, %v412
    %v415 = vsel %vm240, %v413, 0
    %417 = vmatprep.subr.mxu0 0.0
    %418 = vmatpush1.msra.mxu0 %v161
    %419 = vmatprep.subr.mxu0 0.0
    %420 = vmatpush1.msra.mxu0 0.0
    %421 = vmatprep.subr.mxu0 0.0
    %422 = vmatpush1.msra.mxu0 0.0
    %423 = vmatprep.subr.mxu0 0.0
    %424 = vmatpush1.msra.mxu0 0.0
    %425 = vmatprep.subr.mxu0 0.0
    %426 = vmatpush1.msra.mxu0 0.0
    %427 = vmatprep.subr.mxu0 0.0
    %428 = vmatpush1.msra.mxu0 0.0
    %429 = vmatprep.subr.mxu0 0.0
    %430 = vmatpush1.msra.mxu0 0.0
    %431 = vmatprep.subr.mxu0 0.0
    %432 = vmatpush1.msra.mxu0 0.0
    %433 = vmatprep.subr.mxu0 0.0
    %434 = vmatpush1.msra.mxu0 0.0
    %435 = vmatprep.subr.mxu0 0.0
    %436 = vmatpush1.msra.mxu0 0.0
    %437 = vmatprep.subr.mxu0 0.0
    %438 = vmatpush1.msra.mxu0 0.0
    %439 = vmatprep.subr.mxu0 0.0
    %440 = vmatpush1.msra.mxu0 0.0
    %441 = vmatprep.subr.mxu0 0.0
    %442 = vmatpush1.msra.mxu0 0.0
    %443 = vmatprep.subr.mxu0 0.0
    %444 = vmatpush1.msra.mxu0 0.0
    %445 = vmatprep.subr.mxu0 0.0
    %446 = vmatpush1.msra.mxu0 0.0
    %447 = vmatprep.subr.mxu0 0.0
    %448 = vmatpush1.msra.mxu0 0.0
    %449 = vmatprep.subr.mxu0 0.0
    %450 = vmatpush1.msra.mxu0 0.0
    %451 = vmatprep.subr.mxu0 0.0
    %452 = vmatpush1.msra.mxu0 0.0
    %453 = vmatprep.subr.mxu0 0.0
    %454 = vmatpush1.msra.mxu0 0.0
    %455 = vmatprep.subr.mxu0 0.0
    %456 = vmatpush1.msra.mxu0 0.0
    %457 = vmatprep.subr.mxu0 0.0
    %458 = vmatpush1.msra.mxu0 0.0
    %459 = vmatprep.subr.mxu0 0.0
    %460 = vmatpush1.msra.mxu0 0.0
    %461 = vmatprep.subr.mxu0 0.0
    %462 = vmatpush1.msra.mxu0 0.0
    %463 = vmatprep.subr.mxu0 0.0
    %464 = vmatpush1.msra.mxu0 0.0
    %465 = vmatprep.subr.mxu0 0.0
    %466 = vmatpush1.msra.mxu0 0.0
    %467 = vmatprep.subr.mxu0 0.0
    %468 = vmatpush1.msra.mxu0 0.0
    %469 = vmatprep.subr.mxu0 0.0
    %470 = vmatpush1.msra.mxu0 0.0
    %471 = vmatprep.subr.mxu0 0.0
    %472 = vmatpush1.msra.mxu0 0.0
    %473 = vmatprep.subr.mxu0 0.0
    %474 = vmatpush1.msra.mxu0 0.0
    %475 = vmatprep.subr.mxu0 0.0
    %476 = vmatpush1.msra.mxu0 0.0
    %477 = vmatprep.subr.mxu0 0.0
    %478 = vmatpush1.msra.mxu0 0.0
    %479 = vmatprep.subr.mxu0 0.0
    %480 = vmatpush1.msra.mxu0 0.0
    %481 = vmatprep.mubr.f32.mxu0 0.0
    %482 = vmatmul.mubr.f32.gmra.mrb[0].mxu0 %v415
    %v483 = vpop.f32.mrb[0].mxu0
    %v484 = vadd.f32 0.0, %v483
    %v485 = vpop.f32.mrb[0].mxu0
    %486 = vdwg.mxu0
    %487 = vst.msk [vmem:[#allocation2 + $0x8] sm:$0xff] %vm26, %v484
    %488 = vrot.lane.b32.xlu0 %v153, 96
    %v489 = vpop.permute.xlu0 %488
    %490 = vrot.lane.b32.xlu0 %v153, 32
    %v491 = vpop.permute.xlu0 %490
    %v492 = vsel %vm26, %v489, 0
    %v494 = vsel %vm26, %v491, 0
    %496 = vmatprep.subr.mxu0 0.0
    %497 = vmatpush1.xpose.msra.mxu0 %v494
    %498 = vmatprep.subr.mxu0 0.0
    %499 = vmatpush1.xpose.msra.mxu0 0.0
    %500 = vmatprep.subr.mxu0 0.0
    %501 = vmatpush1.xpose.msra.mxu0 0.0
    %502 = vmatprep.subr.mxu0 0.0
    %503 = vmatpush1.xpose.msra.mxu0 0.0
    %504 = vmatprep.subr.mxu0 0.0
    %505 = vmatpush1.xpose.msra.mxu0 0.0
    %506 = vmatprep.subr.mxu0 0.0
    %507 = vmatpush1.xpose.msra.mxu0 0.0
    %508 = vmatprep.subr.mxu0 0.0
    %509 = vmatpush1.xpose.msra.mxu0 0.0
    %510 = vmatprep.subr.mxu0 0.0
    %511 = vmatpush1.xpose.msra.mxu0 0.0
    %512 = vmatprep.subr.mxu0 0.0
    %513 = vmatpush1.xpose.msra.mxu0 0.0
    %514 = vmatprep.subr.mxu0 0.0
    %515 = vmatpush1.xpose.msra.mxu0 0.0
    %516 = vmatprep.subr.mxu0 0.0
    %517 = vmatpush1.xpose.msra.mxu0 0.0
    %518 = vmatprep.subr.mxu0 0.0
    %519 = vmatpush1.xpose.msra.mxu0 0.0
    %520 = vmatprep.subr.mxu0 0.0
    %521 = vmatpush1.xpose.msra.mxu0 0.0
    %522 = vmatprep.subr.mxu0 0.0
    %523 = vmatpush1.xpose.msra.mxu0 0.0
    %524 = vmatprep.subr.mxu0 0.0
    %525 = vmatpush1.xpose.msra.mxu0 0.0
    %526 = vmatprep.subr.mxu0 0.0
    %527 = vmatpush1.xpose.msra.mxu0 0.0
    %528 = vmatprep.subr.mxu0 0.0
    %529 = vmatpush1.xpose.msra.mxu0 0.0
    %530 = vmatprep.subr.mxu0 0.0
    %531 = vmatpush1.xpose.msra.mxu0 0.0
    %532 = vmatprep.subr.mxu0 0.0
    %533 = vmatpush1.xpose.msra.mxu0 0.0
    %534 = vmatprep.subr.mxu0 0.0
    %535 = vmatpush1.xpose.msra.mxu0 0.0
    %536 = vmatprep.subr.mxu0 0.0
    %537 = vmatpush1.xpose.msra.mxu0 0.0
    %538 = vmatprep.subr.mxu0 0.0
    %539 = vmatpush1.xpose.msra.mxu0 0.0
    %540 = vmatprep.subr.mxu0 0.0
    %541 = vmatpush1.xpose.msra.mxu0 0.0
    %542 = vmatprep.subr.mxu0 0.0
    %543 = vmatpush1.xpose.msra.mxu0 0.0
    %544 = vmatprep.subr.mxu0 0.0
    %545 = vmatpush1.xpose.msra.mxu0 0.0
    %546 = vmatprep.subr.mxu0 0.0
    %547 = vmatpush1.xpose.msra.mxu0 0.0
    %548 = vmatprep.subr.mxu0 0.0
    %549 = vmatpush1.xpose.msra.mxu0 0.0
    %550 = vmatprep.subr.mxu0 0.0
    %551 = vmatpush1.xpose.msra.mxu0 0.0
    %552 = vmatprep.subr.mxu0 0.0
    %553 = vmatpush1.xpose.msra.mxu0 0.0
    %554 = vmatprep.subr.mxu0 0.0
    %555 = vmatpush1.xpose.msra.mxu0 0.0
    %556 = vmatprep.subr.mxu0 0.0
    %557 = vmatpush1.xpose.msra.mxu0 0.0
    %558 = vmatprep.subr.mxu0 0.0
    %559 = vmatpush1.xpose.msra.mxu0 0.0
    %560 = vmatprep.mubr.f32.mxu0 0.0
    %561 = vmatmul.mubr.f32.gmra.mrb[0].mxu0 %v492
    %v562 = vpop.f32.mrb[0].mxu0
    %v563 = vadd.f32 0.0, %v562
    %v564 = vpop.f32.mrb[0].mxu0
    %565 = vdwg.mxu0
    %v566 = vsel %vm240, %v563, -inf
    %567 = vmax.xlane.f32.xlu0 %v566
    %v568 = vpop.xlane.xlu0 %567
    %v569 = vsub.f32 %v563, %v568
    %v570 = vmul.f32 %v569, 1.442695
    %v571 = vpow.pop %v570
    %v572 = vsel %vm240, %v571, 0.0
    %573 = vadd.xlane.f32.xlu0 %v572
    %v574 = vpop.xlane.xlu0 %573
    %v575 = vrcp.pop %v574
    %v576 = vmul.f32 %v571, %v575
    %578 = vrot.lane.b32.xlu0 %v155, 96
    %v579 = vpop.permute.xlu0 %578
    %v582 = vsel %vm240, %v576, 0
    %584 = vmatprep.subr.mxu0 0.0
    %585 = vmatpush1.msra.mxu0 %v579
    %586 = vmatprep.subr.mxu0 0.0
    %587 = vmatpush1.msra.mxu0 0.0
    %588 = vmatprep.subr.mxu0 0.0
    %589 = vmatpush1.msra.mxu0 0.0
    %590 = vmatprep.subr.mxu0 0.0
    %591 = vmatpush1.msra.mxu0 0.0
    %592 = vmatprep.subr.mxu0 0.0
    %593 = vmatpush1.msra.mxu0 0.0
    %594 = vmatprep.subr.mxu0 0.0
    %595 = vmatpush1.msra.mxu0 0.0
    %596 = vmatprep.subr.mxu0 0.0
    %597 = vmatpush1.msra.mxu0 0.0
    %598 = vmatprep.subr.mxu0 0.0
    %599 = vmatpush1.msra.mxu0 0.0
    %600 = vmatprep.subr.mxu0 0.0
    %601 = vmatpush1.msra.mxu0 0.0
    %602 = vmatprep.subr.mxu0 0.0
    %603 = vmatpush1.msra.mxu0 0.0
    %604 = vmatprep.subr.mxu0 0.0
    %605 = vmatpush1.msra.mxu0 0.0
    %606 = vmatprep.subr.mxu0 0.0
    %607 = vmatpush1.msra.mxu0 0.0
    %608 = vmatprep.subr.mxu0 0.0
    %609 = vmatpush1.msra.mxu0 0.0
    %610 = vmatprep.subr.mxu0 0.0
    %611 = vmatpush1.msra.mxu0 0.0
    %612 = vmatprep.subr.mxu0 0.0
    %613 = vmatpush1.msra.mxu0 0.0
    %614 = vmatprep.subr.mxu0 0.0
    %615 = vmatpush1.msra.mxu0 0.0
    %616 = vmatprep.subr.mxu0 0.0
    %617 = vmatpush1.msra.mxu0 0.0
    %618 = vmatprep.subr.mxu0 0.0
    %619 = vmatpush1.msra.mxu0 0.0
    %620 = vmatprep.subr.mxu0 0.0
    %621 = vmatpush1.msra.mxu0 0.0
    %622 = vmatprep.subr.mxu0 0.0
    %623 = vmatpush1.msra.mxu0 0.0
    %624 = vmatprep.subr.mxu0 0.0
    %625 = vmatpush1.msra.mxu0 0.0
    %626 = vmatprep.subr.mxu0 0.0
    %627 = vmatpush1.msra.mxu0 0.0
    %628 = vmatprep.subr.mxu0 0.0
    %629 = vmatpush1.msra.mxu0 0.0
    %630 = vmatprep.subr.mxu0 0.0
    %631 = vmatpush1.msra.mxu0 0.0
    %632 = vmatprep.subr.mxu0 0.0
    %633 = vmatpush1.msra.mxu0 0.0
    %634 = vmatprep.subr.mxu0 0.0
    %635 = vmatpush1.msra.mxu0 0.0
    %636 = vmatprep.subr.mxu0 0.0
    %637 = vmatpush1.msra.mxu0 0.0
    %638 = vmatprep.subr.mxu0 0.0
    %639 = vmatpush1.msra.mxu0 0.0
    %640 = vmatprep.subr.mxu0 0.0
    %641 = vmatpush1.msra.mxu0 0.0
    %642 = vmatprep.subr.mxu0 0.0
    %643 = vmatpush1.msra.mxu0 0.0
    %644 = vmatprep.subr.mxu0 0.0
    %645 = vmatpush1.msra.mxu0 0.0
    %646 = vmatprep.subr.mxu0 0.0
    %647 = vmatpush1.msra.mxu0 0.0
    %648 = vmatprep.mubr.f32.mxu0 0.0
    %649 = vmatmul.mubr.f32.gmra.mrb[0].mxu0 %v582
    %v650 = vpop.f32.mrb[0].mxu0
    %v651 = vadd.f32 0.0, %v650
    %v652 = vpop.f32.mrb[0].mxu0
    %653 = vdwg.mxu0
    %655 = vrot.lane.b32.xlu0 %v651, 32
    %v656 = vpop.permute.xlu0 %655
    %vm658 = vcmask 523520
    %659 = vst.msk [vmem:[#allocation2] sm:$0xff] %vm658, %v656
    %660 = vrot.lane.b32.xlu0 %v159, 96
    %v661 = vpop.permute.xlu0 %660
    %662 = vrot.lane.b32.xlu0 %v159, 32
    %v663 = vpop.permute.xlu0 %662
    %v664 = vsel %vm26, %v661, 0
    %v666 = vsel %vm26, %v663, 0
    %668 = vmatprep.subr.mxu0 0.0
    %669 = vmatpush1.xpose.msra.mxu0 %v666
    %670 = vmatprep.subr.mxu0 0.0
    %671 = vmatpush1.xpose.msra.mxu0 0.0
    %672 = vmatprep.subr.mxu0 0.0
    %673 = vmatpush1.xpose.msra.mxu0 0.0
    %674 = vmatprep.subr.mxu0 0.0
    %675 = vmatpush1.xpose.msra.mxu0 0.0
    %676 = vmatprep.subr.mxu0 0.0
    %677 = vmatpush1.xpose.msra.mxu0 0.0
    %678 = vmatprep.subr.mxu0 0.0
    %679 = vmatpush1.xpose.msra.mxu0 0.0
    %680 = vmatprep.subr.mxu0 0.0
    %681 = vmatpush1.xpose.msra.mxu0 0.0
    %682 = vmatprep.subr.mxu0 0.0
    %683 = vmatpush1.xpose.msra.mxu0 0.0
    %684 = vmatprep.subr.mxu0 0.0
    %685 = vmatpush1.xpose.msra.mxu0 0.0
    %686 = vmatprep.subr.mxu0 0.0
    %687 = vmatpush1.xpose.msra.mxu0 0.0
    %688 = vmatprep.subr.mxu0 0.0
    %689 = vmatpush1.xpose.msra.mxu0 0.0
    %690 = vmatprep.subr.mxu0 0.0
    %691 = vmatpush1.xpose.msra.mxu0 0.0
    %692 = vmatprep.subr.mxu0 0.0
    %693 = vmatpush1.xpose.msra.mxu0 0.0
    %694 = vmatprep.subr.mxu0 0.0
    %695 = vmatpush1.xpose.msra.mxu0 0.0
    %696 = vmatprep.subr.mxu0 0.0
    %697 = vmatpush1.xpose.msra.mxu0 0.0
    %698 = vmatprep.subr.mxu0 0.0
    %699 = vmatpush1.xpose.msra.mxu0 0.0
    %700 = vmatprep.subr.mxu0 0.0
    %701 = vmatpush1.xpose.msra.mxu0 0.0
    %702 = vmatprep.subr.mxu0 0.0
    %703 = vmatpush1.xpose.msra.mxu0 0.0
    %704 = vmatprep.subr.mxu0 0.0
    %705 = vmatpush1.xpose.msra.mxu0 0.0
    %706 = vmatprep.subr.mxu0 0.0
    %707 = vmatpush1.xpose.msra.mxu0 0.0
    %708 = vmatprep.subr.mxu0 0.0
    %709 = vmatpush1.xpose.msra.mxu0 0.0
    %710 = vmatprep.subr.mxu0 0.0
    %711 = vmatpush1.xpose.msra.mxu0 0.0
    %712 = vmatprep.subr.mxu0 0.0
    %713 = vmatpush1.xpose.msra.mxu0 0.0
    %714 = vmatprep.subr.mxu0 0.0
    %715 = vmatpush1.xpose.msra.mxu0 0.0
    %716 = vmatprep.subr.mxu0 0.0
    %717 = vmatpush1.xpose.msra.mxu0 0.0
    %718 = vmatprep.subr.mxu0 0.0
    %719 = vmatpush1.xpose.msra.mxu0 0.0
    %720 = vmatprep.subr.mxu0 0.0
    %721 = vmatpush1.xpose.msra.mxu0 0.0
    %722 = vmatprep.subr.mxu0 0.0
    %723 = vmatpush1.xpose.msra.mxu0 0.0
    %724 = vmatprep.subr.mxu0 0.0
    %725 = vmatpush1.xpose.msra.mxu0 0.0
    %726 = vmatprep.subr.mxu0 0.0
    %727 = vmatpush1.xpose.msra.mxu0 0.0
    %728 = vmatprep.subr.mxu0 0.0
    %729 = vmatpush1.xpose.msra.mxu0 0.0
    %730 = vmatprep.subr.mxu0 0.0
    %731 = vmatpush1.xpose.msra.mxu0 0.0
    %732 = vmatprep.mubr.f32.mxu0 0.0
    %733 = vmatmul.mubr.f32.gmra.mrb[0].mxu0 %v664
    %v734 = vpop.f32.mrb[0].mxu0
    %v735 = vadd.f32 0.0, %v734
    %v736 = vpop.f32.mrb[0].mxu0
    %737 = vdwg.mxu0
    %v738 = vsel %vm240, %v735, -inf
    %739 = vmax.xlane.f32.xlu0 %v738
    %v740 = vpop.xlane.xlu0 %739
    %v741 = vsub.f32 %v735, %v740
    %v742 = vmul.f32 %v741, 1.442695
    %v743 = vpow.pop %v742
    %v744 = vsel %vm240, %v743, 0.0
    %745 = vadd.xlane.f32.xlu0 %v744
    %v746 = vpop.xlane.xlu0 %745
    %v747 = vrcp.pop %v746
    %v748 = vmul.f32 %v743, %v747
    %750 = vrot.lane.b32.xlu0 %v161, 96
    %v751 = vpop.permute.xlu0 %750
    %v754 = vsel %vm240, %v748, 0
    %756 = vmatprep.subr.mxu0 0.0
    %757 = vmatpush1.msra.mxu0 %v751
    %758 = vmatprep.subr.mxu0 0.0
    %759 = vmatpush1.msra.mxu0 0.0
    %760 = vmatprep.subr.mxu0 0.0
    %761 = vmatpush1.msra.mxu0 0.0
    %762 = vmatprep.subr.mxu0 0.0
    %763 = vmatpush1.msra.mxu0 0.0
    %764 = vmatprep.subr.mxu0 0.0
    %765 = vmatpush1.msra.mxu0 0.0
    %766 = vmatprep.subr.mxu0 0.0
    %767 = vmatpush1.msra.mxu0 0.0
    %768 = vmatprep.subr.mxu0 0.0
    %769 = vmatpush1.msra.mxu0 0.0
    %770 = vmatprep.subr.mxu0 0.0
    %771 = vmatpush1.msra.mxu0 0.0
    %772 = vmatprep.subr.mxu0 0.0
    %773 = vmatpush1.msra.mxu0 0.0
    %774 = vmatprep.subr.mxu0 0.0
    %775 = vmatpush1.msra.mxu0 0.0
    %776 = vmatprep.subr.mxu0 0.0
    %777 = vmatpush1.msra.mxu0 0.0
    %778 = vmatprep.subr.mxu0 0.0
    %779 = vmatpush1.msra.mxu0 0.0
    %780 = vmatprep.subr.mxu0 0.0
    %781 = vmatpush1.msra.mxu0 0.0
    %782 = vmatprep.subr.mxu0 0.0
    %783 = vmatpush1.msra.mxu0 0.0
    %784 = vmatprep.subr.mxu0 0.0
    %785 = vmatpush1.msra.mxu0 0.0
    %786 = vmatprep.subr.mxu0 0.0
    %787 = vmatpush1.msra.mxu0 0.0
    %788 = vmatprep.subr.mxu0 0.0
    %789 = vmatpush1.msra.mxu0 0.0
    %790 = vmatprep.subr.mxu0 0.0
    %791 = vmatpush1.msra.mxu0 0.0
    %792 = vmatprep.subr.mxu0 0.0
    %793 = vmatpush1.msra.mxu0 0.0
    %794 = vmatprep.subr.mxu0 0.0
    %795 = vmatpush1.msra.mxu0 0.0
    %796 = vmatprep.subr.mxu0 0.0
    %797 = vmatpush1.msra.mxu0 0.0
    %798 = vmatprep.subr.mxu0 0.0
    %799 = vmatpush1.msra.mxu0 0.0
    %800 = vmatprep.subr.mxu0 0.0
    %801 = vmatpush1.msra.mxu0 0.0
    %802 = vmatprep.subr.mxu0 0.0
    %803 = vmatpush1.msra.mxu0 0.0
    %804 = vmatprep.subr.mxu0 0.0
    %805 = vmatpush1.msra.mxu0 0.0
    %806 = vmatprep.subr.mxu0 0.0
    %807 = vmatpush1.msra.mxu0 0.0
    %808 = vmatprep.subr.mxu0 0.0
    %809 = vmatpush1.msra.mxu0 0.0
    %810 = vmatprep.subr.mxu0 0.0
    %811 = vmatpush1.msra.mxu0 0.0
    %812 = vmatprep.subr.mxu0 0.0
    %813 = vmatpush1.msra.mxu0 0.0
    %814 = vmatprep.subr.mxu0 0.0
    %815 = vmatpush1.msra.mxu0 0.0
    %816 = vmatprep.subr.mxu0 0.0
    %817 = vmatpush1.msra.mxu0 0.0
    %818 = vmatprep.subr.mxu0 0.0
    %819 = vmatpush1.msra.mxu0 0.0
    %820 = vmatprep.mubr.f32.mxu0 0.0
    %821 = vmatmul.mubr.f32.gmra.mrb[0].mxu0 %v754
    %v822 = vpop.f32.mrb[0].mxu0
    %v823 = vadd.f32 0.0, %v822
    %v824 = vpop.f32.mrb[0].mxu0
    %825 = vdwg.mxu0
    %827 = vrot.lane.b32.xlu0 %v823, 32
    %v828 = vpop.permute.xlu0 %827
    %830 = vst.msk [vmem:[#allocation2 + $0x8] sm:$0xff] %vm658, %v828
    %v831 = vld [vmem:[#allocation2] sm:$0xff]
    %v832 = vld [vmem:[#allocation2 + $0x8] sm:$0xff]
    %v833 = vld [vmem:[%s4] sm:$0xff]
    %v834 = vld [vmem:[%s4 + $0x8] sm:$0xff]
    %v835 = vld [vmem:[%s4 + $0x10] sm:$0xff]
    %v836 = vld [vmem:[%s4 + $0x18] sm:$0xff]
    %v837 = vld [vmem:[%s4 + $0x20] sm:$0xff]
    %v838 = vld [vmem:[%s4 + $0x28] sm:$0xff]
    %v839 = vld [vmem:[%s4 + $0x30] sm:$0xff]
    %v840 = vld [vmem:[%s4 + $0x38] sm:$0xff]
    %v841 = vld [vmem:[%s5] sm:$0x1]
    %v843 = vlaneseq
    %v844 = vshrl.u32 %v843, 7
    %v845 = vsub.s32 0, %v844
    %v846 = vrot.slane %v841, %v845
    %vm848 = vcmask 523264
    %v850 = vsel %vm848, %v831, 0
    %v853 = vsel %vm848, %v832, 0
    %855 = vmatprep.subr.mxu0 0.0
    %856 = vmatpush1.msra.mxu0 %v833
    %857 = vmatprep.subr.mxu0 0.0
    %858 = vmatpush1.msra.mxu0 %v834
    %859 = vmatprep.subr.mxu0 0.0
    %860 = vmatpush1.msra.mxu0 %v835
    %861 = vmatprep.subr.mxu0 0.0
    %862 = vmatpush1.msra.mxu0 %v836
    %863 = vmatprep.subr.mxu0 0.0
    %864 = vmatpush1.msra.mxu0 %v837
    %865 = vmatprep.subr.mxu0 0.0
    %866 = vmatpush1.msra.mxu0 %v838
    %867 = vmatprep.subr.mxu0 0.0
    %868 = vmatpush1.msra.mxu0 %v839
    %869 = vmatprep.subr.mxu0 0.0
    %870 = vmatpush1.msra.mxu0 %v840
    %871 = vmatprep.subr.mxu0 0.0
    %872 = vmatpush1.msra.mxu0 0.0
    %873 = vmatprep.subr.mxu0 0.0
    %874 = vmatpush1.msra.mxu0 0.0
    %875 = vmatprep.subr.mxu0 0.0
    %876 = vmatpush1.msra.mxu0 0.0
    %877 = vmatprep.subr.mxu0 0.0
    %878 = vmatpush1.msra.mxu0 0.0
    %879 = vmatprep.subr.mxu0 0.0
    %880 = vmatpush1.msra.mxu0 0.0
    %881 = vmatprep.subr.mxu0 0.0
    %882 = vmatpush1.msra.mxu0 0.0
    %883 = vmatprep.subr.mxu0 0.0
    %884 = vmatpush1.msra.mxu0 0.0
    %885 = vmatprep.subr.mxu0 0.0
    %886 = vmatpush1.msra.mxu0 0.0
    %887 = vmatprep.subr.mxu0 0.0
    %888 = vmatpush1.msra.mxu0 0.0
    %889 = vmatprep.subr.mxu0 0.0
    %890 = vmatpush1.msra.mxu0 0.0
    %891 = vmatprep.subr.mxu0 0.0
    %892 = vmatpush1.msra.mxu0 0.0
    %893 = vmatprep.subr.mxu0 0.0
    %894 = vmatpush1.msra.mxu0 0.0
    %895 = vmatprep.subr.mxu0 0.0
    %896 = vmatpush1.msra.mxu0 0.0
    %897 = vmatprep.subr.mxu0 0.0
    %898 = vmatpush1.msra.mxu0 0.0
    %899 = vmatprep.subr.mxu0 0.0
    %900 = vmatpush1.msra.mxu0 0.0
    %901 = vmatprep.subr.mxu0 0.0
    %902 = vmatpush1.msra.mxu0 0.0
    %903 = vmatprep.subr.mxu0 0.0
    %904 = vmatpush1.msra.mxu0 0.0
    %905 = vmatprep.subr.mxu0 0.0
    %906 = vmatpush1.msra.mxu0 0.0
    %907 = vmatprep.subr.mxu0 0.0
    %908 = vmatpush1.msra.mxu0 0.0
    %909 = vmatprep.subr.mxu0 0.0
    %910 = vmatpush1.msra.mxu0 0.0
    %911 = vmatprep.subr.mxu0 0.0
    %912 = vmatpush1.msra.mxu0 0.0
    %913 = vmatprep.subr.mxu0 0.0
    %914 = vmatpush1.msra.mxu0 0.0
    %915 = vmatprep.subr.mxu0 0.0
    %916 = vmatpush1.msra.mxu0 0.0
    %917 = vmatprep.subr.mxu0 0.0
    %918 = vmatpush1.msra.mxu0 0.0
    %919 = vmatprep.mubr.f32.mxu0 0.0
    %920 = vmatmul.mubr.f32.gmra.mrb[0].mxu0 %v850
    %v921 = vpop.f32.mrb[0].mxu0
    %v922 = vadd.f32 %v846, %v921
    %v923 = vpop.f32.mrb[0].mxu0
    %924 = vmatprep.mubr.f32.mxu0 0.0
    %925 = vmatmul.mubr.f32.gmra.mrb[0].mxu0 %v853
    %v926 = vpop.f32.mrb[0].mxu0
    %v927 = vadd.f32 %v846, %v926
    %v928 = vpop.f32.mrb[0].mxu0
    %929 = vdwg.mxu0
    %930 = vst.msk [vmem:[#allocation3] sm:$0xff] %vm26, %v922
    %931 = vst.msk [vmem:[#allocation3 + $0x8] sm:$0xff] %vm26, %v927
    // Predicated region
    $region26: #{tpu_custom_call.1} parent=1 // pred_check
      _
    $region27: #{tpu_custom_call.1} parent=1 // pred_check_branch
      %933 = sbr.rel (0) target = $region29
    $region28: #{tpu_custom_call.1} parent=1 // pred_region
      %s935 = ssub.s32 256, 256
      %936 = vsyncadd [#allocation4], %s935
      %s937 = sshll.u32 [#allocation3], 4
      %s938 = int_to_ptr.vmem [resolvable:$true] %s937
      %943 = dma.vmem_to_hbm [thread:$0]  %s938, 256, %s6, [#allocation4], 128, 128, 8
    $region29: #{tpu_custom_call.1} parent=1 // pred_fallthru
      _
    // Predicated region
    $region30: #{tpu_custom_call.1} parent=1 // pred_check
      _
    $region31: #{tpu_custom_call.1} parent=1 // pred_check_branch
      %945 = sbr.rel (0) target = $region33
    $region32: #{tpu_custom_call.1} parent=1 // pred_region
      %946 = dma.done [#allocation4], 256
    $region33: #{tpu_custom_call.1} parent=1 // pred_fallthru
      _
    %947 = vsyncpa [#allocation4], 1

</llo_original>
